<compile_context>
chip_gen: v6e
topology: v6e:2x2x1
jax: 0.10.0
libtpu: 0.0.40
codegen_flags: <defaults>
</compile_context>

<pallas_src>
import math

import jax
import jax.numpy as jnp
from jax import lax
from jax.experimental import pallas as pl
from jax.experimental.pallas import tpu as pltpu


def _round_up(x, m):
    return (x + m - 1) // m * m


def world_model_kernel(state_ref, action_ref,
                       w1s_ref, folded_ref, b1_ref,
                       w2_ref, b2_ref,
                       w3_ref, b3_ref,
                       out_ref):
    state = state_ref[...]                         # (TB, state_dim) f32
    action = action_ref[...]                       # (TB, 1) int32

    tb = state.shape[0]
    a_pad = folded_ref.shape[0]                    # padded num_actions

    # nn.Embedding + (emb @ W1_act) fused: one-hot(action) @ folded selects the
    # precomputed per-action row exactly (f32 table, exact row select).
    iota = lax.broadcasted_iota(jnp.int32, (tb, a_pad), 1)
    onehot = (iota == action).astype(jnp.float32)               # (TB, A_PAD)
    emb_h = jnp.dot(onehot, folded_ref[...],
                    preferred_element_type=jnp.float32)          # (TB, H_PAD)

    # Layer 1: cat([state, emb]) @ W1 + b1 == state @ W1_state + emb @ W1_act + b1
    h1 = (jnp.dot(state.astype(jnp.bfloat16), w1s_ref[...],
                  preferred_element_type=jnp.float32)
          + emb_h + b1_ref[...])
    h1 = jnp.maximum(h1, 0.0)                                    # ReLU (f32)

    # Layer 2
    h2 = (jnp.dot(h1.astype(jnp.bfloat16), w2_ref[...],
                  preferred_element_type=jnp.float32) + b2_ref[...])
    h2 = jnp.maximum(h2, 0.0)

    # Layer 3 — lane-dense (padded) output store
    out_ref[...] = (jnp.dot(h2.astype(jnp.bfloat16), w3_ref[...],
                            preferred_element_type=jnp.float32) + b3_ref[...])


def prepare_params(params, state_dim, hidden_dim, num_actions):
    """One-time param prep: split W1, fold the embedding through W1_act,
    zero-pad feature dims to 128-lane multiples, cast matmul weights to bf16."""
    h_pad = _round_up(hidden_dim, 128)
    s_pad = _round_up(state_dim, 128)
    a_pad = _round_up(num_actions, 8)

    w1 = params["w1"]                       # (state_dim + emb_dim, hidden)
    w1s = w1[:state_dim]                    # (state_dim, hidden)
    w1a = w1[state_dim:]                    # (emb_dim, hidden)
    folded = params["emb"] @ w1a            # (num_actions, hidden) f32

    def pad2(x, rows, cols):
        return jnp.pad(x, ((0, rows - x.shape[0]), (0, cols - x.shape[1])))

    return {
        "w1s": pad2(w1s, state_dim, h_pad).astype(jnp.bfloat16),
        "folded": pad2(folded, a_pad, h_pad).astype(jnp.float32),
        "b1": pad2(params["b1"], 1, h_pad).astype(jnp.float32),
        "w2": pad2(params["w2"], h_pad, h_pad).astype(jnp.bfloat16),
        "b2": pad2(params["b2"], 1, h_pad).astype(jnp.float32),
        "w3": pad2(params["w3"], h_pad, s_pad).astype(jnp.bfloat16),
        "b3": pad2(params["b3"], 1, s_pad).astype(jnp.float32),
    }


def world_model_forward(state, action, prep, state_dim):
    """state: (B, state_dim) f32; action: (B,) or (B,1) int. Returns (B, state_dim) f32."""
    if action.ndim == 1:
        action = action[:, None]
    action = action.astype(jnp.int32)
    state = state.astype(jnp.float32)

    B, in_feat = state.shape
    h_pad = prep["w2"].shape[0]
    s_pad = prep["w3"].shape[1]
    a_pad = prep["folded"].shape[0]

    # Batch tile: 128 rows for real batches; round small batches up to 16
    # (bf16 sublane-friendly). Padded rows use action=0 / state=0, sliced off.
    tile_b = 128 if B >= 128 else _round_up(B, 16)
    b_pad = _round_up(B, tile_b)
    if b_pad != B:
        state = jnp.pad(state, ((0, b_pad - B), (0, 0)))
        action = jnp.pad(action, ((0, b_pad - B), (0, 0)))

    grid = (b_pad // tile_b,)

    def row_map(i):
        return (i, 0)

    def const_map(i):
        return (0, 0)

    weight_inputs = (prep["w1s"], prep["folded"], prep["b1"],
                     prep["w2"], prep["b2"], prep["w3"], prep["b3"])

    in_specs = (
        [pl.BlockSpec((tile_b, in_feat), row_map),   # state: tiled over batch
         pl.BlockSpec((tile_b, 1), row_map)]         # action indices
        + [pl.BlockSpec(w.shape, const_map) for w in weight_inputs]  # resident weights
    )

    flops = 2 * b_pad * (in_feat * h_pad + a_pad * h_pad
                         + h_pad * h_pad + h_pad * s_pad)
    bytes_accessed = (int(state.size) * 4 + int(action.size) * 4
                      + b_pad * s_pad * 4
                      + sum(int(w.size) * w.dtype.itemsize for w in weight_inputs))

    out = pl.pallas_call(
        world_model_kernel,
        out_shape=jax.ShapeDtypeStruct((b_pad, s_pad), jnp.float32),
        grid=grid,
        in_specs=in_specs,
        out_specs=pl.BlockSpec((tile_b, s_pad), row_map),
        compiler_params=pltpu.CompilerParams(
            dimension_semantics=("parallel",)),
        cost_estimate=pl.CostEstimate(flops=flops, transcendentals=0,
                                      bytes_accessed=bytes_accessed),
    )(state, action, *weight_inputs)

    return out[:B, :state_dim]


def init_params(key, state_dim, num_actions, action_embedding_dim, hidden_dim):
    """Deterministic synthetic init matching the PyTorch module's shapes."""
    ks = jax.random.split(key, 7)
    input_dim = state_dim + action_embedding_dim

    def lin_w(k, fan_in, fan_out):
        bound = 1.0 / math.sqrt(fan_in)
        return jax.random.uniform(k, (fan_in, fan_out), jnp.float32, -bound, bound)

    def lin_b(k, fan_in, fan_out):
        bound = 1.0 / math.sqrt(fan_in)
        return jax.random.uniform(k, (1, fan_out), jnp.float32, -bound, bound)

    return {
        "emb": jax.random.normal(ks[0], (num_actions, action_embedding_dim), jnp.float32),
        "w1": lin_w(ks[1], input_dim, hidden_dim),
        "b1": lin_b(ks[2], input_dim, hidden_dim),
        "w2": lin_w(ks[3], hidden_dim, hidden_dim),
        "b2": lin_b(ks[4], hidden_dim, hidden_dim),
        "w3": lin_w(ks[5], hidden_dim, state_dim),
        "b3": lin_b(ks[6], hidden_dim, state_dim),
    }


def reference_forward(state, action, params):
    """Pure-JAX f32 reference mirroring the PyTorch forward exactly."""
    a = action[:, 0] if action.ndim > 1 else action
    emb = params["emb"][a]                                    # nn.Embedding gather
    x = jnp.concatenate([state, emb], axis=-1)                # torch.cat
    h1 = jnp.maximum(x @ params["w1"] + params["b1"], 0.0)
    h2 = jnp.maximum(h1 @ params["w2"] + params["b2"], 0.0)
    return h2 @ params["w3"] + params["b3"]


if __name__ == "__main__":
    # Small shapes consistent with the module's forward.
    B = 8
    state_dim = 32
    num_actions = 6
    action_embedding_dim = 16
    hidden_dim = 32

    key = jax.random.PRNGKey(0)
    k_params, k_state, k_action = jax.random.split(key, 3)

    params = init_params(k_params, state_dim, num_actions, action_embedding_dim, hidden_dim)
    prep = prepare_params(params, state_dim, hidden_dim, num_actions)

    state = jax.random.normal(k_state, (B, state_dim), jnp.float32)
    action = jax.random.randint(k_action, (B, 1), 0, num_actions)   # (batch, 1) like torch

    out = world_model_forward(state, action, prep, state_dim)
    out = jax.block_until_ready(out)

    ref = reference_forward(state, action.astype(jnp.int32), params)
    assert out.shape == (B, state_dim), out.shape
    # bf16 matmul inputs with f32 accumulation -> small numeric delta vs pure-f32 ref.
    assert jnp.allclose(out, ref, atol=2e-2, rtol=2e-2), \
        float(jnp.max(jnp.abs(out - ref)))

    print("KERNEL_OK")
</pallas_src>

<mosaic_0001>
module attributes {stable_mosaic.version = 11 : i64} {
  func.func @world_model_kernel(%arg0: i32, %arg1: memref<16x32xf32, #tpu.memory_space<vmem>>, %arg2: memref<16x1xi32, #tpu.memory_space<vmem>>, %arg3: memref<32x128xbf16, #tpu.memory_space<vmem>>, %arg4: memref<8x128xf32, #tpu.memory_space<vmem>>, %arg5: memref<1x128xf32, #tpu.memory_space<vmem>>, %arg6: memref<128x128xbf16, #tpu.memory_space<vmem>>, %arg7: memref<1x128xf32, #tpu.memory_space<vmem>>, %arg8: memref<128x128xbf16, #tpu.memory_space<vmem>>, %arg9: memref<1x128xf32, #tpu.memory_space<vmem>>, %arg10: memref<16x128xf32, #tpu.memory_space<vmem>>) attributes {dimension_semantics = [#tpu.dimension_semantics<parallel>], iteration_bounds = array<i64: 1>, scalar_prefetch = 0 : i64, scratch_operands = 0 : i64, tpu.core_type = #tpu.core_type<tc>, window_params = [{transform_indices = @transform_0, window_bounds = array<i64: 16, 32>}, {transform_indices = @transform_1, window_bounds = array<i64: 16, 1>}, {pipeline_mode = #tpu.pipeline_mode<synchronous>, transform_indices = @transform_2, window_bounds = array<i64: 32, 128>}, {pipeline_mode = #tpu.pipeline_mode<synchronous>, transform_indices = @transform_3, window_bounds = array<i64: 8, 128>}, {pipeline_mode = #tpu.pipeline_mode<synchronous>, transform_indices = @transform_4, window_bounds = array<i64: 1, 128>}, {pipeline_mode = #tpu.pipeline_mode<synchronous>, transform_indices = @transform_5, window_bounds = array<i64: 128, 128>}, {pipeline_mode = #tpu.pipeline_mode<synchronous>, transform_indices = @transform_6, window_bounds = array<i64: 1, 128>}, {pipeline_mode = #tpu.pipeline_mode<synchronous>, transform_indices = @transform_7, window_bounds = array<i64: 128, 128>}, {pipeline_mode = #tpu.pipeline_mode<synchronous>, transform_indices = @transform_8, window_bounds = array<i64: 1, 128>}, {transform_indices = @transform_9, window_bounds = array<i64: 16, 128>}]} {
    %c0 = arith.constant 0 : index
    %c0_0 = arith.constant 0 : index
    %0 = vector.load %arg1[%c0, %c0_0] : memref<16x32xf32, #tpu.memory_space<vmem>>, vector<16x32xf32>
    %c0_1 = arith.constant 0 : index
    %c0_2 = arith.constant 0 : index
    %1 = vector.load %arg2[%c0_1, %c0_2] : memref<16x1xi32, #tpu.memory_space<vmem>>, vector<16x1xi32>
    %2 = tpu.iota {dimensions = array<i32: 1>} : vector<16x8xi32>
    %3 = vector.broadcast %1 : vector<16x1xi32> to vector<16x8xi32>
    %4 = arith.cmpi eq, %2, %3 : vector<16x8xi32>
    %5 = arith.extui %4 : vector<16x8xi1> to vector<16x8xi32>
    %6 = arith.sitofp %5 : vector<16x8xi32> to vector<16x8xf32>
    %c0_3 = arith.constant 0 : index
    %c0_4 = arith.constant 0 : index
    %7 = vector.load %arg4[%c0_3, %c0_4] : memref<8x128xf32, #tpu.memory_space<vmem>>, vector<8x128xf32>
    %cst = arith.constant dense<0.000000e+00> : vector<16x128xf32>
    %8 = tpu.matmul %6, %7, %cst {dimension_numbers = #tpu.dot_dimension_numbers<[1], [0], [0], [1], [0, 0, 1, 1], [], []>} : vector<16x8xf32>, vector<8x128xf32>, vector<16x128xf32> -> vector<16x128xf32>
    %9 = arith.truncf %0 : vector<16x32xf32> to vector<16x32xbf16>
    %c0_5 = arith.constant 0 : index
    %c0_6 = arith.constant 0 : index
    %10 = vector.load %arg3[%c0_5, %c0_6] : memref<32x128xbf16, #tpu.memory_space<vmem>>, vector<32x128xbf16>
    %cst_7 = arith.constant dense<0.000000e+00> : vector<16x128xf32>
    %11 = tpu.matmul %9, %10, %cst_7 {dimension_numbers = #tpu.dot_dimension_numbers<[1], [0], [0], [1], [0, 0, 1, 1], [], []>} : vector<16x32xbf16>, vector<32x128xbf16>, vector<16x128xf32> -> vector<16x128xf32>
    %12 = arith.addf %11, %8 : vector<16x128xf32>
    %c0_8 = arith.constant 0 : index
    %c0_9 = arith.constant 0 : index
    %13 = vector.load %arg5[%c0_8, %c0_9] : memref<1x128xf32, #tpu.memory_space<vmem>>, vector<1x128xf32>
    %14 = vector.broadcast %13 : vector<1x128xf32> to vector<16x128xf32>
    %15 = arith.addf %12, %14 : vector<16x128xf32>
    %cst_10 = arith.constant 0.000000e+00 : f32
    %16 = vector.broadcast %cst_10 : f32 to vector<16x128xf32>
    %17 = arith.maximumf %15, %16 : vector<16x128xf32>
    %18 = arith.truncf %17 : vector<16x128xf32> to vector<16x128xbf16>
    %c0_11 = arith.constant 0 : index
    %c0_12 = arith.constant 0 : index
    %19 = vector.load %arg6[%c0_11, %c0_12] : memref<128x128xbf16, #tpu.memory_space<vmem>>, vector<128x128xbf16>
    %cst_13 = arith.constant dense<0.000000e+00> : vector<16x128xf32>
    %20 = tpu.matmul %18, %19, %cst_13 {dimension_numbers = #tpu.dot_dimension_numbers<[1], [0], [0], [1], [0, 0, 1, 1], [], []>} : vector<16x128xbf16>, vector<128x128xbf16>, vector<16x128xf32> -> vector<16x128xf32>
    %c0_14 = arith.constant 0 : index
    %c0_15 = arith.constant 0 : index
    %21 = vector.load %arg7[%c0_14, %c0_15] : memref<1x128xf32, #tpu.memory_space<vmem>>, vector<1x128xf32>
    %22 = vector.broadcast %21 : vector<1x128xf32> to vector<16x128xf32>
    %23 = arith.addf %20, %22 : vector<16x128xf32>
    %cst_16 = arith.constant 0.000000e+00 : f32
    %24 = vector.broadcast %cst_16 : f32 to vector<16x128xf32>
    %25 = arith.maximumf %23, %24 : vector<16x128xf32>
    %26 = arith.truncf %25 : vector<16x128xf32> to vector<16x128xbf16>
    %c0_17 = arith.constant 0 : index
    %c0_18 = arith.constant 0 : index
    %27 = vector.load %arg8[%c0_17, %c0_18] : memref<128x128xbf16, #tpu.memory_space<vmem>>, vector<128x128xbf16>
    %cst_19 = arith.constant dense<0.000000e+00> : vector<16x128xf32>
    %28 = tpu.matmul %26, %27, %cst_19 {dimension_numbers = #tpu.dot_dimension_numbers<[1], [0], [0], [1], [0, 0, 1, 1], [], []>} : vector<16x128xbf16>, vector<128x128xbf16>, vector<16x128xf32> -> vector<16x128xf32>
    %c0_20 = arith.constant 0 : index
    %c0_21 = arith.constant 0 : index
    %29 = vector.load %arg9[%c0_20, %c0_21] : memref<1x128xf32, #tpu.memory_space<vmem>>, vector<1x128xf32>
    %30 = vector.broadcast %29 : vector<1x128xf32> to vector<16x128xf32>
    %31 = arith.addf %28, %30 : vector<16x128xf32>
    %c0_22 = arith.constant 0 : index
    %c0_23 = arith.constant 0 : index
    %32 = vector.load %arg10[%c0_22, %c0_23] : memref<16x128xf32, #tpu.memory_space<vmem>>, vector<16x128xf32>
    tpu.vector_store %arg10[%c0_22, %c0_23], %31 {strides = array<i32>} : memref<16x128xf32, #tpu.memory_space<vmem>>, vector<16x128xf32>,
    return
  }
  func.func @transform_0(%arg0: i32) -> (i32, i32) {
    %c0_i32 = arith.constant 0 : i32
    %c0_i32_0 = arith.constant 0 : i32
    return %arg0, %c0_i32 : i32, i32
  }
  func.func @transform_1(%arg0: i32) -> (i32, i32) {
    %c0_i32 = arith.constant 0 : i32
    %c0_i32_0 = arith.constant 0 : i32
    return %arg0, %c0_i32 : i32, i32
  }
  func.func @transform_2(%arg0: i32) -> (i32, i32) {
    %c0_i32 = arith.constant 0 : i32
    %c0_i32_0 = arith.constant 0 : i32
    %c0_i32_1 = arith.constant 0 : i32
    return %c0_i32, %c0_i32_0 : i32, i32
  }
  func.func @transform_3(%arg0: i32) -> (i32, i32) {
    %c0_i32 = arith.constant 0 : i32
    %c0_i32_0 = arith.constant 0 : i32
    %c0_i32_1 = arith.constant 0 : i32
    return %c0_i32, %c0_i32_0 : i32, i32
  }
  func.func @transform_4(%arg0: i32) -> (i32, i32) {
    %c0_i32 = arith.constant 0 : i32
    %c0_i32_0 = arith.constant 0 : i32
    %c0_i32_1 = arith.constant 0 : i32
    return %c0_i32, %c0_i32_0 : i32, i32
  }
  func.func @transform_5(%arg0: i32) -> (i32, i32) {
    %c0_i32 = arith.constant 0 : i32
    %c0_i32_0 = arith.constant 0 : i32
    %c0_i32_1 = arith.constant 0 : i32
    return %c0_i32, %c0_i32_0 : i32, i32
  }
  func.func @transform_6(%arg0: i32) -> (i32, i32) {
    %c0_i32 = arith.constant 0 : i32
    %c0_i32_0 = arith.constant 0 : i32
    %c0_i32_1 = arith.constant 0 : i32
    return %c0_i32, %c0_i32_0 : i32, i32
  }
  func.func @transform_7(%arg0: i32) -> (i32, i32) {
    %c0_i32 = arith.constant 0 : i32
    %c0_i32_0 = arith.constant 0 : i32
    %c0_i32_1 = arith.constant 0 : i32
    return %c0_i32, %c0_i32_0 : i32, i32
  }
  func.func @transform_8(%arg0: i32) -> (i32, i32) {
    %c0_i32 = arith.constant 0 : i32
    %c0_i32_0 = arith.constant 0 : i32
    %c0_i32_1 = arith.constant 0 : i32
    return %c0_i32, %c0_i32_0 : i32, i32
  }
  func.func @transform_9(%arg0: i32) -> (i32, i32) {
    %c0_i32 = arith.constant 0 : i32
    %c0_i32_0 = arith.constant 0 : i32
    return %arg0, %c0_i32 : i32, i32
  }
}

</mosaic_0001>

<llo_original>
// kernel: tpu_custom_call.1
$region0: #{tpu_custom_call.1}
  #allocation0 [shape = 'u32[]', space=smem, size = 0x4, offset = 0x4, fixed_abs, tag = 'smem constant byte address 0x4 - core index']
  #allocation1 [shape = 'u32[144,128]{1,0:T(1,128)}', space=vmem, size = 0x12000, scoped, tag = 'internal scratch']
  %s0 = inlined_call_operand.vmem [shape: f32[16,32], index: 0, kind: input, shape index: {}]
  %s1 = inlined_call_operand.vmem [shape: s32[16,1], index: 1, kind: input, shape index: {}]
  %s2 = inlined_call_operand.hbm [shape: bf16[32,128], index: 2, kind: input, shape index: {}]
  %s3 = inlined_call_operand.hbm [shape: f32[8,128], index: 3, kind: input, shape index: {}]
  %s4 = inlined_call_operand.vmem [shape: f32[1,128], index: 4, kind: input, shape index: {}]
  %s5 = inlined_call_operand.hbm [shape: bf16[128,128], index: 5, kind: input, shape index: {}]
  %s6 = inlined_call_operand.vmem [shape: f32[1,128], index: 6, kind: input, shape index: {}]
  %s7 = inlined_call_operand.hbm [shape: bf16[128,128], index: 7, kind: input, shape index: {}]
  %s8 = inlined_call_operand.vmem [shape: f32[1,128], index: 8, kind: input, shape index: {}]
  %s9 = inlined_call_operand.hbm [shape: f32[16,128], index: 9, kind: output, shape index: {}]
  %s10 = sld [smem:[#allocation0]]
  $region62: #{tpu_custom_call.1} parent=0
    _
  %s12 = ssub.s32 1, %s10
  %s13 = scalar_select 0, %s12, %s10
  $region1: #{tpu_custom_call.1} parent=0
    #allocation2 [shape = 'u8[8192]{0}', space=vmem, size = 0x2000, scoped, tag = 'input window, operand 2, single buffered']
    #allocation3 [shape = 's32[1]{0}', space=sflag, size = 0x4, scoped, tag = 'scoped memory for tpu_custom_call.1']
    #allocation4 [shape = 's32[1]{0}', space=sflag, size = 0x4, scoped, tag = 'scoped memory for tpu_custom_call.1']
    #allocation5 [shape = 'u8[4096]{0}', space=vmem, size = 0x1000, scoped, tag = 'input window, operand 3, single buffered']
    #allocation6 [shape = 's32[1]{0}', space=sflag, size = 0x4, scoped, tag = 'scoped memory for tpu_custom_call.1']
    #allocation7 [shape = 'u8[32768]{0}', space=vmem, size = 0x8000, scoped, tag = 'input window, operand 5, single buffered']
    #allocation8 [shape = 'u8[32768]{0}', space=vmem, size = 0x8000, scoped, tag = 'input window, operand 7, single buffered']
    #allocation9 [shape = 's32[1]{0}', space=sflag, size = 0x4, scoped, tag = 'scoped memory for tpu_custom_call.1']
    #allocation10 [shape = 'u8[8192]{0}', space=vmem, size = 0x2000, scoped, tag = 'output window, operand 0, single buffered']
    %14 = vsyncpa [#allocation3], 0
    %15 = vsyncpa [#allocation6], 0
    %16 = vsyncpa [#allocation9], 0
    %17 = vsyncpa [#allocation4], 0
    // Predicated region
    $region2: #{tpu_custom_call.1} parent=1 // pred_check
      _
    $region3: #{tpu_custom_call.1} parent=1 // pred_check_branch
      %19 = sbr.rel (0) target = $region5
    $region4: #{tpu_custom_call.1} parent=1 // pred_region
      _
    $region5: #{tpu_custom_call.1} parent=1 // pred_fallthru
      _
    // Predicated region
    $region6: #{tpu_custom_call.1} parent=1 // pred_check
      _
    $region7: #{tpu_custom_call.1} parent=1 // pred_check_branch
      %21 = sbr.rel (0) target = $region9
    $region8: #{tpu_custom_call.1} parent=1 // pred_region
      _
    $region9: #{tpu_custom_call.1} parent=1 // pred_fallthru
      _
    // Predicated region
    $region10: #{tpu_custom_call.1} parent=1 // pred_check
      _
    $region11: #{tpu_custom_call.1} parent=1 // pred_check_branch
      %23 = sbr.rel (0) target = $region13
    $region12: #{tpu_custom_call.1} parent=1 // pred_region
      %s25 = ssub.s32 256, 256
      %26 = vsyncadd [#allocation3], %s25
      %s27 = sshll.u32 [#allocation2], 4
      %s28 = int_to_ptr.vmem [resolvable:$true] %s27
      %33 = dma.hbm_to_vmem [thread:$0]  %s2, 256, %s28, [#allocation3], 64, 64, 4
    $region13: #{tpu_custom_call.1} parent=1 // pred_fallthru
      _
    // Predicated region
    $region14: #{tpu_custom_call.1} parent=1 // pred_check
      _
    $region15: #{tpu_custom_call.1} parent=1 // pred_check_branch
      %35 = sbr.rel (0) target = $region17
    $region16: #{tpu_custom_call.1} parent=1 // pred_region
      %s37 = ssub.s32 128, 128
      %38 = vsyncadd [#allocation6], %s37
      %s40 = sshll.u32 [#allocation5], 4
      %s41 = int_to_ptr.vmem [resolvable:$true] %s40
      %43 = dma.hbm_to_vmem [thread:$0]  %s3, 128, %s41, [#allocation6]
    $region17: #{tpu_custom_call.1} parent=1 // pred_fallthru
      _
    // Predicated region
    $region18: #{tpu_custom_call.1} parent=1 // pred_check
      _
    $region19: #{tpu_custom_call.1} parent=1 // pred_check_branch
      %45 = sbr.rel (0) target = $region21
    $region20: #{tpu_custom_call.1} parent=1 // pred_region
      _
    $region21: #{tpu_custom_call.1} parent=1 // pred_fallthru
      _
    // Predicated region
    $region22: #{tpu_custom_call.1} parent=1 // pred_check
      _
    $region23: #{tpu_custom_call.1} parent=1 // pred_check_branch
      %47 = sbr.rel (0) target = $region25
    $region24: #{tpu_custom_call.1} parent=1 // pred_region
      %s49 = ssub.s32 1024, 1024
      %50 = vsyncadd [#allocation6], %s49
      %s51 = sshll.u32 [#allocation7], 4
      %s52 = int_to_ptr.vmem [resolvable:$true] %s51
      %57 = dma.hbm_to_vmem [thread:$0]  %s5, 1024, %s52, [#allocation6], 64, 64, 4
    $region25: #{tpu_custom_call.1} parent=1 // pred_fallthru
      _
    // Predicated region
    $region26: #{tpu_custom_call.1} parent=1 // pred_check
      _
    $region27: #{tpu_custom_call.1} parent=1 // pred_check_branch
      %59 = sbr.rel (0) target = $region29
    $region28: #{tpu_custom_call.1} parent=1 // pred_region
      _
    $region29: #{tpu_custom_call.1} parent=1 // pred_fallthru
      _
    // Predicated region
    $region30: #{tpu_custom_call.1} parent=1 // pred_check
      _
    $region31: #{tpu_custom_call.1} parent=1 // pred_check_branch
      %61 = sbr.rel (0) target = $region33
    $region32: #{tpu_custom_call.1} parent=1 // pred_region
      %s63 = ssub.s32 1024, 1024
      %64 = vsyncadd [#allocation9], %s63
      %s65 = sshll.u32 [#allocation8], 4
      %s66 = int_to_ptr.vmem [resolvable:$true] %s65
      %71 = dma.hbm_to_vmem [thread:$0]  %s7, 1024, %s66, [#allocation9], 64, 64, 4
    $region33: #{tpu_custom_call.1} parent=1 // pred_fallthru
      _
    // Predicated region
    $region34: #{tpu_custom_call.1} parent=1 // pred_check
      _
    $region35: #{tpu_custom_call.1} parent=1 // pred_check_branch
      %73 = sbr.rel (0) target = $region37
    $region36: #{tpu_custom_call.1} parent=1 // pred_region
      _
    $region37: #{tpu_custom_call.1} parent=1 // pred_fallthru
      _
    // Predicated region
    $region38: #{tpu_custom_call.1} parent=1 // pred_check
      _
    $region39: #{tpu_custom_call.1} parent=1 // pred_check_branch
      %75 = sbr.rel (0) target = $region41
    $region40: #{tpu_custom_call.1} parent=1 // pred_region
      %76 = dma.done [#allocation3], 256
    $region41: #{tpu_custom_call.1} parent=1 // pred_fallthru
      _
    // Predicated region
    $region42: #{tpu_custom_call.1} parent=1 // pred_check
      _
    $region43: #{tpu_custom_call.1} parent=1 // pred_check_branch
      %78 = sbr.rel (0) target = $region45
    $region44: #{tpu_custom_call.1} parent=1 // pred_region
      %79 = dma.done [#allocation6], 128
    $region45: #{tpu_custom_call.1} parent=1 // pred_fallthru
      _
    // Predicated region
    $region46: #{tpu_custom_call.1} parent=1 // pred_check
      _
    $region47: #{tpu_custom_call.1} parent=1 // pred_check_branch
      %81 = sbr.rel (0) target = $region49
    $region48: #{tpu_custom_call.1} parent=1 // pred_region
      %82 = dma.done [#allocation6], 1024
    $region49: #{tpu_custom_call.1} parent=1 // pred_fallthru
      _
    // Predicated region
    $region50: #{tpu_custom_call.1} parent=1 // pred_check
      _
    $region51: #{tpu_custom_call.1} parent=1 // pred_check_branch
      %84 = sbr.rel (0) target = $region53
    $region52: #{tpu_custom_call.1} parent=1 // pred_region
      %85 = dma.done [#allocation9], 1024
    $region53: #{tpu_custom_call.1} parent=1 // pred_fallthru
      _
    %v87 = vld [vmem:[%s0] sm:$0xff]
    %v88 = vld [vmem:[%s0 + $0x8] sm:$0xff]
    %v89 = vld [vmem:[%s1] sm:$0xff]
    %v90 = vld [vmem:[%s1 + $0x8] sm:$0xff]
    %v91 = vlaneseq
    %v92 = vand.u32 %v91, 127
    %93 = vset.pattern.permute.xlu0 0
    %94 = vperm.xlu0 %93, %v89
    %v95 = vpop.permute.xlu0 %94
    %96 = vset.pattern.permute.xlu0 0
    %97 = vperm.xlu0 %96, %v90
    %v98 = vpop.permute.xlu0 %97
    %vm99 = vcmp.eq.s32.totalorder %v92, %v95
    %vm100 = vcmp.eq.s32.totalorder %v92, %v98
    %v101 = vsel %vm99, 1, 0
    %v102 = vsel %vm100, 1, 0
    %v103 = vcvt.s32.f32 %v101
    %v104 = vcvt.s32.f32 %v102
    %v105 = vld [vmem:[#allocation5] sm:$0xff]
    %vm106 = vcmask 64512
    %v108 = vsel %vm106, %v103, 0
    %v111 = vsel %vm106, %v104, 0
    %113 = vmatprep.subr.mxu0 0.0
    %114 = vmatpush1.msra.mxu0 0.0
    %115 = vmatprep.subr.mxu0 0.0
    %116 = vmatpush1.msra.mxu0 0.0
    %117 = vmatprep.subr.mxu0 0.0
    %118 = vmatpush1.msra.mxu0 0.0
    %119 = vmatprep.subr.mxu0 0.0
    %120 = vmatpush1.msra.mxu0 0.0
    %121 = vmatprep.subr.mxu0 0.0
    %122 = vmatpush1.msra.mxu0 0.0
    %123 = vmatprep.subr.mxu0 0.0
    %124 = vmatpush1.msra.mxu0 0.0
    %125 = vmatprep.subr.mxu0 0.0
    %126 = vmatpush1.msra.mxu0 0.0
    %127 = vmatprep.subr.mxu0 0.0
    %128 = vmatpush1.msra.mxu0 0.0
    %129 = vmatprep.subr.mxu0 0.0
    %130 = vmatpush1.msra.mxu0 0.0
    %131 = vmatprep.subr.mxu0 0.0
    %132 = vmatpush1.msra.mxu0 0.0
    %133 = vmatprep.subr.mxu0 0.0
    %134 = vmatpush1.msra.mxu0 0.0
    %135 = vmatprep.subr.mxu0 0.0
    %136 = vmatpush1.msra.mxu0 0.0
    %137 = vmatprep.subr.mxu0 0.0
    %138 = vmatpush1.msra.mxu0 0.0
    %139 = vmatprep.subr.mxu0 0.0
    %140 = vmatpush1.msra.mxu0 0.0
    %141 = vmatprep.subr.mxu0 0.0
    %142 = vmatpush1.msra.mxu0 0.0
    %143 = vmatprep.subr.mxu0 0.0
    %144 = vmatpush1.msra.mxu0 %v105
    %145 = vmatprep.subr.mxu0 0.0
    %146 = vmatpush2.msra.mxu0 0.0
    %147 = vmatprep.subr.mxu0 0.0
    %148 = vmatpush2.msra.mxu0 0.0
    %149 = vmatprep.subr.mxu0 0.0
    %150 = vmatpush2.msra.mxu0 0.0
    %151 = vmatprep.subr.mxu0 0.0
    %152 = vmatpush2.msra.mxu0 0.0
    %153 = vmatprep.subr.mxu0 0.0
    %154 = vmatpush2.msra.mxu0 0.0
    %155 = vmatprep.subr.mxu0 0.0
    %156 = vmatpush2.msra.mxu0 0.0
    %157 = vmatprep.subr.mxu0 0.0
    %158 = vmatpush2.msra.mxu0 0.0
    %159 = vmatprep.subr.mxu0 0.0
    %160 = vmatpush2.msra.mxu0 0.0
    %161 = vmatprep.subr.mxu0 0.0
    %162 = vmatpush2.msra.mxu0 0.0
    %163 = vmatprep.subr.mxu0 0.0
    %164 = vmatpush2.msra.mxu0 0.0
    %165 = vmatprep.subr.mxu0 0.0
    %166 = vmatpush2.msra.mxu0 0.0
    %167 = vmatprep.subr.mxu0 0.0
    %168 = vmatpush2.msra.mxu0 0.0
    %169 = vmatprep.subr.mxu0 0.0
    %170 = vmatpush2.msra.mxu0 0.0
    %171 = vmatprep.subr.mxu0 0.0
    %172 = vmatpush2.msra.mxu0 0.0
    %173 = vmatprep.subr.mxu0 0.0
    %174 = vmatpush2.msra.mxu0 0.0
    %175 = vmatprep.subr.mxu0 0.0
    %176 = vmatpush2.msra.mxu0 0.0
    %177 = vmatprep.mubr.f32.mxu0 0.0
    %178 = vmatmul.mubr.f32.gmra.mxu0 %v108
    %v179 = vpop.f32.mrf.mxu0
    %v180 = vadd.f32 0.0, %v179
    %v181 = vpop.f32.mrf.mxu0
    %182 = vmatprep.mubr.f32.mxu0 0.0
    %183 = vmatmul.mubr.f32.gmra.mxu0 %v111
    %v184 = vpop.f32.mrf.mxu0
    %v185 = vadd.f32 0.0, %v184
    %v186 = vpop.f32.mrf.mxu0
    %187 = vdwg.mxu0
    %v188 = vpack.c.bf16 %v88, %v87
    %v189 = vld [vmem:[#allocation2] sm:$0xf]
    %v190 = vld [vmem:[#allocation2 + $0x4] sm:$0xf]
    %v191 = vld [vmem:[#allocation2 + $0x8] sm:$0xf]
    %v192 = vld [vmem:[#allocation2 + $0xc] sm:$0xf]
    %v197 = vunpack.c.l.b16 %v189
    %v198 = vunpack.c.l.b16 %v190
    %v199 = vunpack.c.l.b16 %v191
    %v200 = vunpack.c.l.b16 %v192
    %v201 = vpack.c.b16 %v198, %v197
    %v202 = vpack.c.b16 %v200, %v199
    %vm205 = vcmask 261120
    %v207 = vsel %vm205, %v188, 0
    %209 = vmatprep.subr.bf16.mxu0 0
    %210 = vmatpush1.bf16.msra.mxu0 0
    %211 = vmatprep.subr.bf16.mxu0 0
    %212 = vmatpush1.bf16.msra.mxu0 0
    %213 = vmatprep.subr.bf16.mxu0 0
    %214 = vmatpush1.bf16.msra.mxu0 0
    %215 = vmatprep.subr.bf16.mxu0 0
    %216 = vmatpush1.bf16.msra.mxu0 0
    %217 = vmatprep.subr.bf16.mxu0 0
    %218 = vmatpush1.bf16.msra.mxu0 0
    %219 = vmatprep.subr.bf16.mxu0 0
    %220 = vmatpush1.bf16.msra.mxu0 0
    %221 = vmatprep.subr.bf16.mxu0 0
    %222 = vmatpush1.bf16.msra.mxu0 %v202
    %223 = vmatprep.subr.bf16.mxu0 0
    %224 = vmatpush1.bf16.msra.mxu0 %v201
    %225 = vmatprep.subr.bf16.mxu0 0
    %226 = vmatpush2.bf16.msra.mxu0 0
    %227 = vmatprep.subr.bf16.mxu0 0
    %228 = vmatpush2.bf16.msra.mxu0 0
    %229 = vmatprep.subr.bf16.mxu0 0
    %230 = vmatpush2.bf16.msra.mxu0 0
    %231 = vmatprep.subr.bf16.mxu0 0
    %232 = vmatpush2.bf16.msra.mxu0 0
    %233 = vmatprep.subr.bf16.mxu0 0
    %234 = vmatpush2.bf16.msra.mxu0 0
    %235 = vmatprep.subr.bf16.mxu0 0
    %236 = vmatpush2.bf16.msra.mxu0 0
    %237 = vmatprep.subr.bf16.mxu0 0
    %238 = vmatpush2.bf16.msra.mxu0 0
    %239 = vmatprep.subr.bf16.mxu0 0
    %240 = vmatpush2.bf16.msra.mxu0 0
    %241 = vmatprep.mubr.bf16.mxu0 0
    %242 = vmatmul.mubr.bf16.gmra.mxu0 %v207
    %v243 = vpop.f32.mrf.mxu0
    %v244 = vadd.f32 %v180, %v243
    %v245 = vpop.f32.mrf.mxu0
    %v246 = vpop.f32.mrf.mxu0
    %v247 = vadd.f32 %v185, %v246
    %v248 = vpop.f32.mrf.mxu0
    %249 = vdwg.mxu0
    %v250 = vld [vmem:[%s4] sm:$0x1]
    %v252 = vlaneseq
    %v253 = vshrl.u32 %v252, 7
    %v254 = vsub.s32 0, %v253
    %v255 = vrot.slane %v250, %v254
    %v257 = vadd.f32 %v244, %v255
    %v258 = vadd.f32 %v247, %v255
    %v259 = vmax.f32 %v257, 0.0
    %v260 = vmax.f32 %v258, 0.0
    %v261 = vpack.c.bf16 %v260, %v259
    %v262 = vld [vmem:[#allocation7] sm:$0xf]
    %v263 = vld [vmem:[#allocation7 + $0x4] sm:$0xf]
    %v264 = vld [vmem:[#allocation7 + $0x8] sm:$0xf]
    %v265 = vld [vmem:[#allocation7 + $0xc] sm:$0xf]
    %v266 = vld [vmem:[#allocation7 + $0x10] sm:$0xf]
    %v267 = vld [vmem:[#allocation7 + $0x14] sm:$0xf]
    %v268 = vld [vmem:[#allocation7 + $0x18] sm:$0xf]
    %v269 = vld [vmem:[#allocation7 + $0x1c] sm:$0xf]
    %v270 = vld [vmem:[#allocation7 + $0x20] sm:$0xf]
    %v271 = vld [vmem:[#allocation7 + $0x24] sm:$0xf]
    %v272 = vld [vmem:[#allocation7 + $0x28] sm:$0xf]
    %v273 = vld [vmem:[#allocation7 + $0x2c] sm:$0xf]
    %v274 = vld [vmem:[#allocation7 + $0x30] sm:$0xf]
    %v275 = vld [vmem:[#allocation7 + $0x34] sm:$0xf]
    %v276 = vld [vmem:[#allocation7 + $0x38] sm:$0xf]
    %v277 = vld [vmem:[#allocation7 + $0x3c] sm:$0xf]
    %v278 = vld [vmem:[%s6] sm:$0x1]
    %v280 = vlaneseq
    %v281 = vshrl.u32 %v280, 7
    %v282 = vsub.s32 0, %v281
    %v283 = vrot.slane %v278, %v282
    %v301 = vunpack.c.l.b16 %v262
    %v302 = vunpack.c.l.b16 %v263
    %v303 = vunpack.c.l.b16 %v264
    %v304 = vunpack.c.l.b16 %v265
    %v305 = vunpack.c.l.b16 %v266
    %v306 = vunpack.c.l.b16 %v267
    %v307 = vunpack.c.l.b16 %v268
    %v308 = vunpack.c.l.b16 %v269
    %v309 = vunpack.c.l.b16 %v270
    %v310 = vunpack.c.l.b16 %v271
    %v311 = vunpack.c.l.b16 %v272
    %v312 = vunpack.c.l.b16 %v273
    %v313 = vunpack.c.l.b16 %v274
    %v314 = vunpack.c.l.b16 %v275
    %v315 = vunpack.c.l.b16 %v276
    %v316 = vunpack.c.l.b16 %v277
    %v317 = vpack.c.b16 %v302, %v301
    %v318 = vpack.c.b16 %v304, %v303
    %v319 = vpack.c.b16 %v306, %v305
    %v320 = vpack.c.b16 %v308, %v307
    %v321 = vpack.c.b16 %v310, %v309
    %v322 = vpack.c.b16 %v312, %v311
    %v323 = vpack.c.b16 %v314, %v313
    %v324 = vpack.c.b16 %v316, %v315
    %333 = vmatprep.subr.bf16.mxu0 0
    %334 = vmatpush1.bf16.msra.mxu0 %v324
    %335 = vmatprep.subr.bf16.mxu0 0
    %336 = vmatpush1.bf16.msra.mxu0 %v323
    %337 = vmatprep.subr.bf16.mxu0 0
    %338 = vmatpush1.bf16.msra.mxu0 %v322
    %339 = vmatprep.subr.bf16.mxu0 0
    %340 = vmatpush1.bf16.msra.mxu0 %v321
    %341 = vmatprep.subr.bf16.mxu0 0
    %342 = vmatpush1.bf16.msra.mxu0 %v320
    %343 = vmatprep.subr.bf16.mxu0 0
    %344 = vmatpush1.bf16.msra.mxu0 %v319
    %345 = vmatprep.subr.bf16.mxu0 0
    %346 = vmatpush1.bf16.msra.mxu0 %v318
    %347 = vmatprep.subr.bf16.mxu0 0
    %348 = vmatpush1.bf16.msra.mxu0 %v317
    %349 = vmatprep.subr.bf16.mxu0 0
    %350 = vmatpush2.bf16.msra.mxu0 0
    %351 = vmatprep.subr.bf16.mxu0 0
    %352 = vmatpush2.bf16.msra.mxu0 0
    %353 = vmatprep.subr.bf16.mxu0 0
    %354 = vmatpush2.bf16.msra.mxu0 0
    %355 = vmatprep.subr.bf16.mxu0 0
    %356 = vmatpush2.bf16.msra.mxu0 0
    %357 = vmatprep.subr.bf16.mxu0 0
    %358 = vmatpush2.bf16.msra.mxu0 0
    %359 = vmatprep.subr.bf16.mxu0 0
    %360 = vmatpush2.bf16.msra.mxu0 0
    %361 = vmatprep.subr.bf16.mxu0 0
    %362 = vmatpush2.bf16.msra.mxu0 0
    %363 = vmatprep.subr.bf16.mxu0 0
    %364 = vmatpush2.bf16.msra.mxu0 0
    %365 = vmatprep.mubr.bf16.mxu0 0
    %366 = vmatmul.mubr.bf16.gmra.mxu0 %v261
    %v367 = vpop.f32.mrf.mxu0
    %v368 = vadd.f32 %v283, %v367
    %v369 = vpop.f32.mrf.mxu0
    %v370 = vpop.f32.mrf.mxu0
    %v371 = vadd.f32 %v283, %v370
    %v372 = vpop.f32.mrf.mxu0
    %373 = vdwg.mxu0
    %v374 = vmax.f32 %v368, 0.0
    %v375 = vmax.f32 %v371, 0.0
    %v376 = vpack.c.bf16 %v375, %v374
    %v377 = vld [vmem:[#allocation8] sm:$0xf]
    %v378 = vld [vmem:[#allocation8 + $0x4] sm:$0xf]
    %v379 = vld [vmem:[#allocation8 + $0x8] sm:$0xf]
    %v380 = vld [vmem:[#allocation8 + $0xc] sm:$0xf]
    %v381 = vld [vmem:[#allocation8 + $0x10] sm:$0xf]
    %v382 = vld [vmem:[#allocation8 + $0x14] sm:$0xf]
    %v383 = vld [vmem:[#allocation8 + $0x18] sm:$0xf]
    %v384 = vld [vmem:[#allocation8 + $0x1c] sm:$0xf]
    %v385 = vld [vmem:[#allocation8 + $0x20] sm:$0xf]
    %v386 = vld [vmem:[#allocation8 + $0x24] sm:$0xf]
    %v387 = vld [vmem:[#allocation8 + $0x28] sm:$0xf]
    %v388 = vld [vmem:[#allocation8 + $0x2c] sm:$0xf]
    %v389 = vld [vmem:[#allocation8 + $0x30] sm:$0xf]
    %v390 = vld [vmem:[#allocation8 + $0x34] sm:$0xf]
    %v391 = vld [vmem:[#allocation8 + $0x38] sm:$0xf]
    %v392 = vld [vmem:[#allocation8 + $0x3c] sm:$0xf]
    %v393 = vld [vmem:[%s8] sm:$0x1]
    %v395 = vlaneseq
    %v396 = vshrl.u32 %v395, 7
    %v397 = vsub.s32 0, %v396
    %v398 = vrot.slane %v393, %v397
    %v416 = vunpack.c.l.b16 %v377
    %v417 = vunpack.c.l.b16 %v378
    %v418 = vunpack.c.l.b16 %v379
    %v419 = vunpack.c.l.b16 %v380
    %v420 = vunpack.c.l.b16 %v381
    %v421 = vunpack.c.l.b16 %v382
    %v422 = vunpack.c.l.b16 %v383
    %v423 = vunpack.c.l.b16 %v384
    %v424 = vunpack.c.l.b16 %v385
    %v425 = vunpack.c.l.b16 %v386
    %v426 = vunpack.c.l.b16 %v387
    %v427 = vunpack.c.l.b16 %v388
    %v428 = vunpack.c.l.b16 %v389
    %v429 = vunpack.c.l.b16 %v390
    %v430 = vunpack.c.l.b16 %v391
    %v431 = vunpack.c.l.b16 %v392
    %v432 = vpack.c.b16 %v417, %v416
    %v433 = vpack.c.b16 %v419, %v418
    %v434 = vpack.c.b16 %v421, %v420
    %v435 = vpack.c.b16 %v423, %v422
    %v436 = vpack.c.b16 %v425, %v424
    %v437 = vpack.c.b16 %v427, %v426
    %v438 = vpack.c.b16 %v429, %v428
    %v439 = vpack.c.b16 %v431, %v430
    %448 = vmatprep.subr.bf16.mxu0 0
    %449 = vmatpush1.bf16.msra.mxu0 %v439
    %450 = vmatprep.subr.bf16.mxu0 0
    %451 = vmatpush1.bf16.msra.mxu0 %v438
    %452 = vmatprep.subr.bf16.mxu0 0
    %453 = vmatpush1.bf16.msra.mxu0 %v437
    %454 = vmatprep.subr.bf16.mxu0 0
    %455 = vmatpush1.bf16.msra.mxu0 %v436
    %456 = vmatprep.subr.bf16.mxu0 0
    %457 = vmatpush1.bf16.msra.mxu0 %v435
    %458 = vmatprep.subr.bf16.mxu0 0
    %459 = vmatpush1.bf16.msra.mxu0 %v434
    %460 = vmatprep.subr.bf16.mxu0 0
    %461 = vmatpush1.bf16.msra.mxu0 %v433
    %462 = vmatprep.subr.bf16.mxu0 0
    %463 = vmatpush1.bf16.msra.mxu0 %v432
    %464 = vmatprep.subr.bf16.mxu0 0
    %465 = vmatpush2.bf16.msra.mxu0 0
    %466 = vmatprep.subr.bf16.mxu0 0
    %467 = vmatpush2.bf16.msra.mxu0 0
    %468 = vmatprep.subr.bf16.mxu0 0
    %469 = vmatpush2.bf16.msra.mxu0 0
    %470 = vmatprep.subr.bf16.mxu0 0
    %471 = vmatpush2.bf16.msra.mxu0 0
    %472 = vmatprep.subr.bf16.mxu0 0
    %473 = vmatpush2.bf16.msra.mxu0 0
    %474 = vmatprep.subr.bf16.mxu0 0
    %475 = vmatpush2.bf16.msra.mxu0 0
    %476 = vmatprep.subr.bf16.mxu0 0
    %477 = vmatpush2.bf16.msra.mxu0 0
    %478 = vmatprep.subr.bf16.mxu0 0
    %479 = vmatpush2.bf16.msra.mxu0 0
    %480 = vmatprep.mubr.bf16.mxu0 0
    %481 = vmatmul.mubr.bf16.gmra.mxu0 %v376
    %v482 = vpop.f32.mrf.mxu0
    %v483 = vadd.f32 %v398, %v482
    %v484 = vpop.f32.mrf.mxu0
    %v485 = vpop.f32.mrf.mxu0
    %v486 = vadd.f32 %v398, %v485
    %v487 = vpop.f32.mrf.mxu0
    %488 = vdwg.mxu0
    %489 = vst [vmem:[#allocation10] sm:$0xff] %v483
    %490 = vst [vmem:[#allocation10 + $0x8] sm:$0xff] %v486
    // Predicated region
    $region54: #{tpu_custom_call.1} parent=1 // pred_check
      _
    $region55: #{tpu_custom_call.1} parent=1 // pred_check_branch
      %492 = sbr.rel (0) target = $region57
    $region56: #{tpu_custom_call.1} parent=1 // pred_region
      %s494 = ssub.s32 256, 256
      %495 = vsyncadd [#allocation4], %s494
      %s496 = sshll.u32 [#allocation10], 4
      %s497 = int_to_ptr.vmem [resolvable:$true] %s496
      %502 = dma.vmem_to_hbm [thread:$0]  %s497, 256, %s9, [#allocation4], 128, 128, 8
    $region57: #{tpu_custom_call.1} parent=1 // pred_fallthru
      _
    // Predicated region
    $region58: #{tpu_custom_call.1} parent=1 // pred_check
      _
    $region59: #{tpu_custom_call.1} parent=1 // pred_check_branch
      %504 = sbr.rel (0) target = $region61
    $region60: #{tpu_custom_call.1} parent=1 // pred_region
      %505 = dma.done [#allocation4], 256
    $region61: #{tpu_custom_call.1} parent=1 // pred_fallthru
      _
    %506 = vsyncpa [#allocation3], 1
    %507 = vsyncpa [#allocation6], 1
    %508 = vsyncpa [#allocation9], 1
    %509 = vsyncpa [#allocation4], 1

</llo_original>
